<compile_context>
chip_gen: v7x
topology: tpu7x:2x2x1
jax: 0.10.0
libtpu: 0.0.40
codegen_flags: <defaults>
</compile_context>

<pallas_src>
import numpy as np
import jax
import jax.numpy as jnp
from jax.experimental import pallas as pl
from jax.experimental.pallas import tpu as pltpu


def _round_up(x, m):
    return ((x + m - 1) // m) * m


# ---------------------------------------------------------------------------
# Kernel 1: embedding row-gather + GRU cell + additive attention + context.
# Grid-less; everything here is tiny compared to the logits projection.
# ---------------------------------------------------------------------------
def gru_attention_kernel(
    tok_ref,        # (B,)      int32, SMEM
    emb_hbm,        # (V, E)    f32,   HBM (pl.ANY) -- only B rows are DMA'd
    h0_ref,         # (B, H)    f32
    enc_ref,        # (B, S, 2H) f32
    bias_ref,       # (B, S)    f32    additive mask bias (0 / -1e5)
    w_ih_ref,       # (E, 3H)   fused GRU input weights   (r|z|n)
    w_hh_ref,       # (H, 3H)   fused GRU hidden weights  (r|z|n)
    b_ih_ref,       # (1, 3H)
    b_hh_ref,       # (1, 3H)
    wa_h_ref,       # (H, H)    attn weight, hidden part
    wa_e_ref,       # (2H, H)   attn weight, encoder part
    b_attn_ref,     # (1, H)
    v_ref,          # (1, H)    score vector
    hidden_ref,     # out (B, H)
    context_ref,    # out (B, 2H)
    attnw_ref,      # out (B, S)
    x_buf,          # scratch VMEM (B, E)
    gather_sem,     # scratch DMA sems (B,)
):
    B, H = h0_ref.shape
    S = enc_ref.shape[1]
    f32 = jnp.float32

    # ---- embedding gather: DMA only the B needed rows out of HBM -------------
    copies = []
    for b in range(B):                       # B is a small static Python int
        cp = pltpu.make_async_copy(
            emb_hbm.at[pl.ds(tok_ref[b], 1), :],
            x_buf.at[pl.ds(b, 1), :],
            gather_sem.at[b])
        cp.start()
        copies.append(cp)
    for cp in copies:
        cp.wait()
    x = x_buf[...]                                                    # (B, E)

    h0 = h0_ref[...]                                                  # (B, H)

    # ---- GRU cell (single step) with fused gate matmuls -----------------------
    gi = jnp.dot(x, w_ih_ref[...], preferred_element_type=f32) + b_ih_ref[...]
    gh = jnp.dot(h0, w_hh_ref[...], preferred_element_type=f32) + b_hh_ref[...]
    r = jax.nn.sigmoid(gi[:, 0:H] + gh[:, 0:H])
    z = jax.nn.sigmoid(gi[:, H:2 * H] + gh[:, H:2 * H])
    n = jnp.tanh(gi[:, 2 * H:3 * H] + r * gh[:, 2 * H:3 * H])
    h_new = (1.0 - z) * n + z * h0                                    # (B, H)

    # ---- additive attention ---------------------------------------------------
    enc = enc_ref[...]                                                # (B, S, 2H)
    e_part = jnp.dot(enc.reshape(B * S, 2 * H), wa_e_ref[...],
                     preferred_element_type=f32).reshape(B, S, H)
    h_part = jnp.dot(h_new, wa_h_ref[...], preferred_element_type=f32)
    energy = jnp.tanh(h_part[:, None, :] + e_part
                      + b_attn_ref[...][None, :, :])                  # (B, S, H)

    # scores: VPU mul + XLU lane-reduce (no q==1 MXU pushes)
    scores = jnp.sum(energy * v_ref[...][None, :, :], axis=-1)        # (B, S)
    scores = scores + bias_ref[...]                                   # masked

    # softmax over S (lane axis)
    m = jnp.max(scores, axis=-1, keepdims=True)
    p = jnp.exp(scores - m)
    denom = jnp.sum(p, axis=-1, keepdims=True)
    inv = pl.reciprocal(denom, approx=True)
    inv = inv * (2.0 - denom * inv)          # one Newton step -> full f32 accuracy
    attw = p * inv                                                    # (B, S)

    # context: VPU mul + sublane reduce (B is tiny, MXU gives nothing here)
    context = jnp.sum(attw[:, :, None] * enc, axis=1)                 # (B, 2H)

    hidden_ref[...] = h_new
    context_ref[...] = context
    attnw_ref[...] = attw


# ---------------------------------------------------------------------------
# Kernel 2: V-tiled, streamed logits projection.
#   predict[:, j*TV:(j+1)*TV] = h_new @ W_h[:, tile] + context @ W_c[:, tile] + b
# Weight tiles are auto double-buffered by the BlockSpec pipeline; the grid
# axis is "parallel" so v7x's two TensorCores split the V tiles.
# ---------------------------------------------------------------------------
def logits_kernel(h_ref, c_ref, w_h_ref, w_c_ref, b_ref, out_ref):
    wdt = w_h_ref.dtype          # bf16 weights, f32 accumulation
    out_ref[...] = (
        jnp.dot(h_ref[...].astype(wdt), w_h_ref[...],
                preferred_element_type=jnp.float32)
        + jnp.dot(c_ref[...].astype(wdt), w_c_ref[...],
                  preferred_element_type=jnp.float32)
        + b_ref[...])


# ---------------------------------------------------------------------------
# One-time (model-load) weight splitting / transposition / padding / casting.
# ---------------------------------------------------------------------------
def prepare_params(params, *, logits_dtype=jnp.bfloat16, tv=512):
    H = params["W_hh"].shape[1]
    V = params["W_l1"].shape[0]

    # tile width: multiple of 128, no larger than the (128-padded) vocab
    tv = min(tv, _round_up(V, 128))
    vp = _round_up(V, tv)
    pad = vp - V

    w_l1_t = params["W_l1"].T                     # (3H, V)
    w_l1_h = jnp.pad(w_l1_t[:H], ((0, 0), (0, pad))).astype(logits_dtype)
    w_l1_c = jnp.pad(w_l1_t[H:], ((0, 0), (0, pad))).astype(logits_dtype)
    b_l1 = jnp.pad(params["b_l1"].reshape(1, -1), ((0, 0), (0, pad)))

    return dict(
        emb=params["emb"],                        # stays in HBM; row-gathered
        w_ih_t=params["W_ih"].T,                  # (E, 3H)  order r|z|n
        w_hh_t=params["W_hh"].T,                  # (H, 3H)
        b_ih=params["b_ih"].reshape(1, -1),       # (1, 3H)
        b_hh=params["b_hh"].reshape(1, -1),       # (1, 3H)
        wa_h=params["W_attn"][:, :H].T,           # (H, H)
        wa_e=params["W_attn"][:, H:].T,           # (2H, H)
        b_attn=params["b_attn"].reshape(1, -1),   # (1, H)
        v_w=params["v_w"].reshape(1, -1),         # (1, H)
        w_l1_h=w_l1_h,                            # (H, Vp)  bf16
        w_l1_c=w_l1_c,                            # (2H, Vp) bf16
        b_l1=b_l1,                                # (1, Vp)
        vocab=V, vocab_padded=vp, tv=tv,
    )


def att_decoder_forward(tok, h0, enc, mask, prep):
    B, H = h0.shape
    S = enc.shape[1]
    E = prep["emb"].shape[1]
    V, Vp, TV = prep["vocab"], prep["vocab_padded"], prep["tv"]

    # additive mask bias precomputed in the wrapper (no in-kernel compare/select)
    mask_bias = jnp.where(mask == 0, -100000.0, 0.0).astype(jnp.float32)

    vmem = pl.BlockSpec(memory_space=pltpu.MemorySpace.VMEM)
    smem = pl.BlockSpec(memory_space=pltpu.MemorySpace.SMEM)
    hbm = pl.BlockSpec(memory_space=pl.ANY)

    # ---- stage 1: gather + GRU + attention + context -------------------------
    hidden, context, attw = pl.pallas_call(
        gru_attention_kernel,
        out_shape=(jax.ShapeDtypeStruct((B, H), jnp.float32),
                   jax.ShapeDtypeStruct((B, 2 * H), jnp.float32),
                   jax.ShapeDtypeStruct((B, S), jnp.float32)),
        in_specs=[smem, hbm] + [vmem] * 11,
        out_specs=(vmem, vmem, vmem),
        scratch_shapes=[pltpu.VMEM((B, E), jnp.float32),
                        pltpu.SemaphoreType.DMA((B,))],
        compiler_params=pltpu.CompilerParams(
            vmem_limit_bytes=32 * 1024 * 1024),
    )(tok.astype(jnp.int32), prep["emb"], h0, enc, mask_bias,
      prep["w_ih_t"], prep["w_hh_t"], prep["b_ih"], prep["b_hh"],
      prep["wa_h"], prep["wa_e"], prep["b_attn"], prep["v_w"])

    # ---- stage 2: V-tiled, streamed, megacore-parallel logits projection -----
    # Per-tile VMEM: 2 buffers * 3H*TV*2B (bf16 weights) + bias/out tiles +
    # resident (B,3H) activations  ->  tiny vs the 32 MiB limit; TV can be
    # grown per generation (halve it, or keep 2-deep buffering, on v7x).
    n_tiles = Vp // TV
    predict_padded = pl.pallas_call(
        logits_kernel,
        grid=(n_tiles,),
        out_shape=jax.ShapeDtypeStruct((B, Vp), jnp.float32),
        in_specs=[pl.BlockSpec((B, H), lambda j: (0, 0)),
                  pl.BlockSpec((B, 2 * H), lambda j: (0, 0)),
                  pl.BlockSpec((H, TV), lambda j: (0, j)),
                  pl.BlockSpec((2 * H, TV), lambda j: (0, j)),
                  pl.BlockSpec((1, TV), lambda j: (0, j))],
        out_specs=pl.BlockSpec((B, TV), lambda j: (0, j)),
        compiler_params=pltpu.CompilerParams(
            dimension_semantics=("parallel",),
            vmem_limit_bytes=32 * 1024 * 1024),
    )(hidden, context, prep["w_l1_h"], prep["w_l1_c"], prep["b_l1"])

    predict = predict_padded[:, :V]
    # module returns attention weights as (B, 1, S); reshape outside the kernel
    return predict, hidden, attw.reshape(B, 1, S)


def reference(tok, h0, enc, mask, params):
    """Pure-JAX mirror of the PyTorch forward (for verification)."""
    x = params["emb"][tok]                                      # (B, E)
    gi = x @ params["W_ih"].T + params["b_ih"]
    gh = h0 @ params["W_hh"].T + params["b_hh"]
    ir, iz, inn = jnp.split(gi, 3, axis=1)
    hr, hz, hn = jnp.split(gh, 3, axis=1)
    r = jax.nn.sigmoid(ir + hr)
    z = jax.nn.sigmoid(iz + hz)
    n = jnp.tanh(inn + r * hn)
    h_new = (1.0 - z) * n + z * h0
    B, S, _ = enc.shape
    h_rep = jnp.repeat(h_new[:, None, :], S, axis=1)
    energy = jnp.tanh(jnp.concatenate([h_rep, enc], axis=2) @ params["W_attn"].T
                      + params["b_attn"])
    att = (energy @ params["v_w"].T)[..., 0]
    att = jnp.where(mask == 0, -100000.0, att)
    att = jax.nn.softmax(att, axis=1)
    context = jnp.einsum("bs,bse->be", att, enc)
    predict = (jnp.concatenate([h_new, context], axis=1) @ params["W_l1"].T
               + params["b_l1"])
    return predict, h_new, att[:, None, :]


if __name__ == "__main__":
    B, S, E, H, V = 2, 8, 16, 32, 64   # batch, src-len, emb-dim, hidden, vocab
    key = jax.random.PRNGKey(0)
    ks = jax.random.split(key, 12)
    params = dict(
        emb=jax.random.normal(ks[0], (V, E), jnp.float32) * 0.1,   # weight_matrix
        W_ih=jax.random.normal(ks[1], (3 * H, E), jnp.float32) * 0.1,
        b_ih=jax.random.normal(ks[2], (3 * H,), jnp.float32) * 0.1,
        W_hh=jax.random.normal(ks[3], (3 * H, H), jnp.float32) * 0.1,
        b_hh=jax.random.normal(ks[4], (3 * H,), jnp.float32) * 0.1,
        W_attn=jax.random.normal(ks[5], (H, 3 * H), jnp.float32) * 0.1,
        b_attn=jax.random.normal(ks[6], (H,), jnp.float32) * 0.1,
        v_w=jax.random.normal(ks[7], (1, H), jnp.float32) * 0.1,
        W_l1=jax.random.normal(ks[8], (V, 3 * H), jnp.float32) * 0.1,
        b_l1=jax.random.normal(ks[9], (V,), jnp.float32) * 0.1,
    )
    tok = jax.random.randint(ks[10], (B,), 0, V, jnp.int32)         # `sent`
    h0 = jax.random.normal(ks[11], (B, H), jnp.float32)             # decoder hidden
    enc = jax.random.normal(jax.random.PRNGKey(1), (B, S, 2 * H), jnp.float32)
    lengths = jnp.array([S, 5], dtype=jnp.int32)
    mask = (jnp.arange(S)[None, :] < lengths[:, None]).astype(jnp.int32)

    prep = prepare_params(params)   # hoisted: runs once, not per decode step
    predict, hidden, attw = att_decoder_forward(tok, h0, enc, mask, prep)
    jax.block_until_ready((predict, hidden, attw))

    p_ref, h_ref, a_ref = reference(tok, h0, enc, mask, params)
    # hidden / attention weights are computed entirely in f32 -> tight tolerance;
    # logits use bf16 streamed weights (perf feedback) -> bf16-level tolerance.
    np.testing.assert_allclose(np.asarray(hidden), np.asarray(h_ref), rtol=1e-4, atol=1e-4)
    np.testing.assert_allclose(np.asarray(attw), np.asarray(a_ref), rtol=1e-4, atol=1e-4)
    np.testing.assert_allclose(np.asarray(predict), np.asarray(p_ref), rtol=3e-2, atol=3e-2)
    print("KERNEL_OK")
</pallas_src>

<mosaic_0001>
module attributes {stable_mosaic.version = 11 : i64} {
  func.func @gru_attention_kernel(%arg0: memref<2xi32, #tpu.memory_space<smem>>, %arg1: memref<64x16xf32, #tpu.memory_space<any>>, %arg2: memref<2x32xf32, #tpu.memory_space<vmem>>, %arg3: memref<2x8x64xf32, #tpu.memory_space<vmem>>, %arg4: memref<2x8xf32, #tpu.memory_space<vmem>>, %arg5: memref<16x96xf32, #tpu.memory_space<vmem>>, %arg6: memref<32x96xf32, #tpu.memory_space<vmem>>, %arg7: memref<1x96xf32, #tpu.memory_space<vmem>>, %arg8: memref<1x96xf32, #tpu.memory_space<vmem>>, %arg9: memref<32x32xf32, #tpu.memory_space<vmem>>, %arg10: memref<64x32xf32, #tpu.memory_space<vmem>>, %arg11: memref<1x32xf32, #tpu.memory_space<vmem>>, %arg12: memref<1x32xf32, #tpu.memory_space<vmem>>, %arg13: memref<2x32xf32, #tpu.memory_space<vmem>>, %arg14: memref<2x64xf32, #tpu.memory_space<vmem>>, %arg15: memref<2x8xf32, #tpu.memory_space<vmem>>, %arg16: memref<2x16xf32, #tpu.memory_space<vmem>>, %arg17: memref<2x!tpu.dma_semaphore, #tpu.memory_space<semaphore_mem>>) attributes {dimension_semantics = [], scalar_prefetch = 0 : i64, scratch_operands = 2 : i64, tpu.core_type = #tpu.core_type<tc>} {
    %c0 = arith.constant 0 : index
    %0 = memref.load %arg0[%c0] : memref<2xi32, #tpu.memory_space<smem>>
    %c0_i32 = arith.constant 0 : i32
    %c0_i32_0 = arith.constant 0 : i32
    %1 = tpu.memref_slice %arg1[%0, %c0_i32_0] : memref<64x16xf32, #tpu.memory_space<any>> -> memref<1x16xf32, #tpu.memory_space<any>>
    %c0_i32_1 = arith.constant 0 : i32
    %c0_i32_2 = arith.constant 0 : i32
    %2 = tpu.memref_slice %arg16[%c0_i32_1, %c0_i32_2] : memref<2x16xf32, #tpu.memory_space<vmem>> -> memref<1x16xf32, #tpu.memory_space<vmem>>
    %3 = tpu.memref_slice %arg17[%c0_i32] : memref<2x!tpu.dma_semaphore, #tpu.memory_space<semaphore_mem>> -> memref<1x!tpu.dma_semaphore, #tpu.memory_space<semaphore_mem>>
    %4 = tpu.memref_squeeze %3 : memref<1x!tpu.dma_semaphore, #tpu.memory_space<semaphore_mem>> -> memref<!tpu.dma_semaphore, #tpu.memory_space<semaphore_mem>>
    tpu.enqueue_dma source(%1 : memref<1x16xf32, #tpu.memory_space<any>>) target(%2 : memref<1x16xf32, #tpu.memory_space<vmem>>) target_semaphore(%4 : memref<!tpu.dma_semaphore, #tpu.memory_space<semaphore_mem>>)
    %c1 = arith.constant 1 : index
    %5 = memref.load %arg0[%c1] : memref<2xi32, #tpu.memory_space<smem>>
    %c1_i32 = arith.constant 1 : i32
    %c0_i32_3 = arith.constant 0 : i32
    %6 = tpu.memref_slice %arg1[%5, %c0_i32_3] : memref<64x16xf32, #tpu.memory_space<any>> -> memref<1x16xf32, #tpu.memory_space<any>>
    %c1_i32_4 = arith.constant 1 : i32
    %c0_i32_5 = arith.constant 0 : i32
    %7 = tpu.memref_slice %arg16[%c1_i32_4, %c0_i32_5] : memref<2x16xf32, #tpu.memory_space<vmem>> -> memref<1x16xf32, #tpu.memory_space<vmem>>
    %8 = tpu.memref_slice %arg17[%c1_i32] : memref<2x!tpu.dma_semaphore, #tpu.memory_space<semaphore_mem>> -> memref<1x!tpu.dma_semaphore, #tpu.memory_space<semaphore_mem>>
    %9 = tpu.memref_squeeze %8 : memref<1x!tpu.dma_semaphore, #tpu.memory_space<semaphore_mem>> -> memref<!tpu.dma_semaphore, #tpu.memory_space<semaphore_mem>>
    tpu.enqueue_dma source(%6 : memref<1x16xf32, #tpu.memory_space<any>>) target(%7 : memref<1x16xf32, #tpu.memory_space<vmem>>) target_semaphore(%9 : memref<!tpu.dma_semaphore, #tpu.memory_space<semaphore_mem>>)
    %c0_i32_6 = arith.constant 0 : i32
    %c0_i32_7 = arith.constant 0 : i32
    %10 = tpu.memref_slice %arg1[%0, %c0_i32_7] : memref<64x16xf32, #tpu.memory_space<any>> -> memref<1x16xf32, #tpu.memory_space<any>>
    %c0_i32_8 = arith.constant 0 : i32
    %c0_i32_9 = arith.constant 0 : i32
    %11 = tpu.memref_slice %arg16[%c0_i32_8, %c0_i32_9] : memref<2x16xf32, #tpu.memory_space<vmem>> -> memref<1x16xf32, #tpu.memory_space<vmem>>
    %12 = tpu.memref_slice %arg17[%c0_i32_6] : memref<2x!tpu.dma_semaphore, #tpu.memory_space<semaphore_mem>> -> memref<1x!tpu.dma_semaphore, #tpu.memory_space<semaphore_mem>>
    %13 = tpu.memref_squeeze %12 : memref<1x!tpu.dma_semaphore, #tpu.memory_space<semaphore_mem>> -> memref<!tpu.dma_semaphore, #tpu.memory_space<semaphore_mem>>
    tpu.wait_dma2 semaphore(%13 : memref<!tpu.dma_semaphore, #tpu.memory_space<semaphore_mem>>) src(%10 : memref<1x16xf32, #tpu.memory_space<any>>) dst(%11 : memref<1x16xf32, #tpu.memory_space<vmem>>)
    %c1_i32_10 = arith.constant 1 : i32
    %c0_i32_11 = arith.constant 0 : i32
    %14 = tpu.memref_slice %arg1[%5, %c0_i32_11] : memref<64x16xf32, #tpu.memory_space<any>> -> memref<1x16xf32, #tpu.memory_space<any>>
    %c1_i32_12 = arith.constant 1 : i32
    %c0_i32_13 = arith.constant 0 : i32
    %15 = tpu.memref_slice %arg16[%c1_i32_12, %c0_i32_13] : memref<2x16xf32, #tpu.memory_space<vmem>> -> memref<1x16xf32, #tpu.memory_space<vmem>>
    %16 = tpu.memref_slice %arg17[%c1_i32_10] : memref<2x!tpu.dma_semaphore, #tpu.memory_space<semaphore_mem>> -> memref<1x!tpu.dma_semaphore, #tpu.memory_space<semaphore_mem>>
    %17 = tpu.memref_squeeze %16 : memref<1x!tpu.dma_semaphore, #tpu.memory_space<semaphore_mem>> -> memref<!tpu.dma_semaphore, #tpu.memory_space<semaphore_mem>>
    tpu.wait_dma2 semaphore(%17 : memref<!tpu.dma_semaphore, #tpu.memory_space<semaphore_mem>>) src(%14 : memref<1x16xf32, #tpu.memory_space<any>>) dst(%15 : memref<1x16xf32, #tpu.memory_space<vmem>>)
    %c0_14 = arith.constant 0 : index
    %c0_15 = arith.constant 0 : index
    %18 = vector.load %arg16[%c0_14, %c0_15] : memref<2x16xf32, #tpu.memory_space<vmem>>, vector<2x16xf32>
    %c0_16 = arith.constant 0 : index
    %c0_17 = arith.constant 0 : index
    %19 = vector.load %arg2[%c0_16, %c0_17] : memref<2x32xf32, #tpu.memory_space<vmem>>, vector<2x32xf32>
    %c0_18 = arith.constant 0 : index
    %c0_19 = arith.constant 0 : index
    %20 = vector.load %arg5[%c0_18, %c0_19] : memref<16x96xf32, #tpu.memory_space<vmem>>, vector<16x96xf32>
    %cst = arith.constant dense<0.000000e+00> : vector<2x96xf32>
    %21 = tpu.matmul %18, %20, %cst {dimension_numbers = #tpu.dot_dimension_numbers<[1], [0], [0], [1], [0, 0, 1, 1], [], []>} : vector<2x16xf32>, vector<16x96xf32>, vector<2x96xf32> -> vector<2x96xf32>
    %c0_20 = arith.constant 0 : index
    %c0_21 = arith.constant 0 : index
    %22 = vector.load %arg7[%c0_20, %c0_21] : memref<1x96xf32, #tpu.memory_space<vmem>>, vector<1x96xf32>
    %23 = vector.broadcast %22 : vector<1x96xf32> to vector<2x96xf32>
    %24 = arith.addf %21, %23 : vector<2x96xf32>
    %c0_22 = arith.constant 0 : index
    %c0_23 = arith.constant 0 : index
    %25 = vector.load %arg6[%c0_22, %c0_23] : memref<32x96xf32, #tpu.memory_space<vmem>>, vector<32x96xf32>
    %cst_24 = arith.constant dense<0.000000e+00> : vector<2x96xf32>
    %26 = tpu.matmul %19, %25, %cst_24 {dimension_numbers = #tpu.dot_dimension_numbers<[1], [0], [0], [1], [0, 0, 1, 1], [], []>} : vector<2x32xf32>, vector<32x96xf32>, vector<2x96xf32> -> vector<2x96xf32>
    %c0_25 = arith.constant 0 : index
    %c0_26 = arith.constant 0 : index
    %27 = vector.load %arg8[%c0_25, %c0_26] : memref<1x96xf32, #tpu.memory_space<vmem>>, vector<1x96xf32>
    %28 = vector.broadcast %27 : vector<1x96xf32> to vector<2x96xf32>
    %29 = arith.addf %26, %28 : vector<2x96xf32>
    %30 = vector.extract_strided_slice %24 {offsets = [0, 0], sizes = [2, 32], strides = [1, 1]} : vector<2x96xf32> to vector<2x32xf32>
    %31 = vector.extract_strided_slice %29 {offsets = [0, 0], sizes = [2, 32], strides = [1, 1]} : vector<2x96xf32> to vector<2x32xf32>
    %32 = arith.addf %30, %31 : vector<2x32xf32>
    %33 = arith.negf %32 : vector<2x32xf32>
    %34 = math.exp %33 : vector<2x32xf32>
    %cst_27 = arith.constant 1.000000e+00 : f32
    %35 = vector.broadcast %cst_27 : f32 to vector<2x32xf32>
    %36 = arith.addf %35, %34 : vector<2x32xf32>
    %37 = arith.divf %35, %36 : vector<2x32xf32>
    %38 = vector.extract_strided_slice %24 {offsets = [0, 32], sizes = [2, 32], strides = [1, 1]} : vector<2x96xf32> to vector<2x32xf32>
    %39 = vector.extract_strided_slice %29 {offsets = [0, 32], sizes = [2, 32], strides = [1, 1]} : vector<2x96xf32> to vector<2x32xf32>
    %40 = arith.addf %38, %39 : vector<2x32xf32>
    %41 = arith.negf %40 : vector<2x32xf32>
    %42 = math.exp %41 : vector<2x32xf32>
    %cst_28 = arith.constant 1.000000e+00 : f32
    %43 = vector.broadcast %cst_28 : f32 to vector<2x32xf32>
    %44 = arith.addf %43, %42 : vector<2x32xf32>
    %45 = arith.divf %43, %44 : vector<2x32xf32>
    %46 = vector.extract_strided_slice %24 {offsets = [0, 64], sizes = [2, 32], strides = [1, 1]} : vector<2x96xf32> to vector<2x32xf32>
    %47 = vector.extract_strided_slice %29 {offsets = [0, 64], sizes = [2, 32], strides = [1, 1]} : vector<2x96xf32> to vector<2x32xf32>
    %48 = arith.mulf %37, %47 : vector<2x32xf32>
    %49 = arith.addf %46, %48 : vector<2x32xf32>
    %50 = math.tanh %49 : vector<2x32xf32>
    %cst_29 = arith.constant 1.000000e+00 : f32
    %51 = vector.broadcast %cst_29 : f32 to vector<2x32xf32>
    %52 = arith.subf %51, %45 : vector<2x32xf32>
    %53 = arith.mulf %52, %50 : vector<2x32xf32>
    %54 = arith.mulf %45, %19 : vector<2x32xf32>
    %55 = arith.addf %53, %54 : vector<2x32xf32>
    %c0_30 = arith.constant 0 : index
    %c0_31 = arith.constant 0 : index
    %c0_32 = arith.constant 0 : index
    %56 = vector.load %arg3[%c0_30, %c0_31, %c0_32] : memref<2x8x64xf32, #tpu.memory_space<vmem>>, vector<2x8x64xf32>
    %57 = vector.shape_cast %56 : vector<2x8x64xf32> to vector<16x64xf32>
    %c0_33 = arith.constant 0 : index
    %c0_34 = arith.constant 0 : index
    %58 = vector.load %arg10[%c0_33, %c0_34] : memref<64x32xf32, #tpu.memory_space<vmem>>, vector<64x32xf32>
    %cst_35 = arith.constant dense<0.000000e+00> : vector<16x32xf32>
    %59 = tpu.matmul %57, %58, %cst_35 {dimension_numbers = #tpu.dot_dimension_numbers<[1], [0], [0], [1], [0, 0, 1, 1], [], []>} : vector<16x64xf32>, vector<64x32xf32>, vector<16x32xf32> -> vector<16x32xf32>
    %60 = vector.shape_cast %59 : vector<16x32xf32> to vector<2x8x32xf32>
    %c0_36 = arith.constant 0 : index
    %c0_37 = arith.constant 0 : index
    %61 = vector.load %arg9[%c0_36, %c0_37] : memref<32x32xf32, #tpu.memory_space<vmem>>, vector<32x32xf32>
    %cst_38 = arith.constant dense<0.000000e+00> : vector<2x32xf32>
    %62 = tpu.matmul %55, %61, %cst_38 {dimension_numbers = #tpu.dot_dimension_numbers<[1], [0], [0], [1], [0, 0, 1, 1], [], []>} : vector<2x32xf32>, vector<32x32xf32>, vector<2x32xf32> -> vector<2x32xf32>
    %63 = vector.shape_cast %62 : vector<2x32xf32> to vector<2x1x32xf32>
    %64 = vector.broadcast %63 : vector<2x1x32xf32> to vector<2x8x32xf32>
    %65 = arith.addf %64, %60 : vector<2x8x32xf32>
    %c0_39 = arith.constant 0 : index
    %c0_40 = arith.constant 0 : index
    %66 = vector.load %arg11[%c0_39, %c0_40] : memref<1x32xf32, #tpu.memory_space<vmem>>, vector<1x32xf32>
    %67 = vector.shape_cast %66 : vector<1x32xf32> to vector<1x1x32xf32>
    %68 = vector.broadcast %67 : vector<1x1x32xf32> to vector<2x8x32xf32>
    %69 = arith.addf %65, %68 : vector<2x8x32xf32>
    %70 = math.tanh %69 : vector<2x8x32xf32>
    %c0_41 = arith.constant 0 : index
    %c0_42 = arith.constant 0 : index
    %71 = vector.load %arg12[%c0_41, %c0_42] : memref<1x32xf32, #tpu.memory_space<vmem>>, vector<1x32xf32>
    %72 = vector.shape_cast %71 : vector<1x32xf32> to vector<1x1x32xf32>
    %73 = vector.broadcast %72 : vector<1x1x32xf32> to vector<2x8x32xf32>
    %74 = arith.mulf %70, %73 : vector<2x8x32xf32>
    %cst_43 = arith.constant dense<0.000000e+00> : vector<2x8xf32>
    %75 = vector.multi_reduction <add>, %74, %cst_43 [2] : vector<2x8x32xf32> to vector<2x8xf32>
    %c0_44 = arith.constant 0 : index
    %c0_45 = arith.constant 0 : index
    %76 = vector.load %arg4[%c0_44, %c0_45] : memref<2x8xf32, #tpu.memory_space<vmem>>, vector<2x8xf32>
    %77 = arith.addf %75, %76 : vector<2x8xf32>
    %cst_46 = arith.constant dense<0xFF800000> : vector<2xf32>
    %78 = vector.multi_reduction <maximumf>, %77, %cst_46 [1] : vector<2x8xf32> to vector<2xf32>
    %79 = vector.shape_cast %78 : vector<2xf32> to vector<2x1xf32>
    %80 = vector.broadcast %79 : vector<2x1xf32> to vector<2x8xf32>
    %81 = arith.subf %77, %80 : vector<2x8xf32>
    %82 = math.exp %81 : vector<2x8xf32>
    %cst_47 = arith.constant dense<0.000000e+00> : vector<2xf32>
    %83 = vector.multi_reduction <add>, %82, %cst_47 [1] : vector<2x8xf32> to vector<2xf32>
    %84 = vector.shape_cast %83 : vector<2xf32> to vector<2x1xf32>
    %85 = tpu.reciprocal %84 {approx = true} : vector<2x1xf32> -> vector<2x1xf32>
    %86 = arith.mulf %84, %85 : vector<2x1xf32>
    %cst_48 = arith.constant 2.000000e+00 : f32
    %87 = vector.broadcast %cst_48 : f32 to vector<2x1xf32>
    %88 = arith.subf %87, %86 : vector<2x1xf32>
    %89 = arith.mulf %85, %88 : vector<2x1xf32>
    %90 = vector.broadcast %89 : vector<2x1xf32> to vector<2x8xf32>
    %91 = arith.mulf %82, %90 : vector<2x8xf32>
    %92 = vector.shape_cast %91 : vector<2x8xf32> to vector<2x8x1xf32>
    %93 = vector.broadcast %92 : vector<2x8x1xf32> to vector<2x8x64xf32>
    %94 = arith.mulf %93, %56 : vector<2x8x64xf32>
    %cst_49 = arith.constant dense<0.000000e+00> : vector<2x64xf32>
    %95 = vector.multi_reduction <add>, %94, %cst_49 [1] : vector<2x8x64xf32> to vector<2x64xf32>
    %c0_50 = arith.constant 0 : index
    %c0_51 = arith.constant 0 : index
    %96 = vector.load %arg13[%c0_50, %c0_51] : memref<2x32xf32, #tpu.memory_space<vmem>>, vector<2x32xf32>
    tpu.vector_store %arg13[%c0_50, %c0_51], %55 {strides = array<i32>} : memref<2x32xf32, #tpu.memory_space<vmem>>, vector<2x32xf32>,
    %c0_52 = arith.constant 0 : index
    %c0_53 = arith.constant 0 : index
    %97 = vector.load %arg14[%c0_52, %c0_53] : memref<2x64xf32, #tpu.memory_space<vmem>>, vector<2x64xf32>
    tpu.vector_store %arg14[%c0_52, %c0_53], %95 {strides = array<i32>} : memref<2x64xf32, #tpu.memory_space<vmem>>, vector<2x64xf32>,
    %c0_54 = arith.constant 0 : index
    %c0_55 = arith.constant 0 : index
    %98 = vector.load %arg15[%c0_54, %c0_55] : memref<2x8xf32, #tpu.memory_space<vmem>>, vector<2x8xf32>
    tpu.vector_store %arg15[%c0_54, %c0_55], %91 {strides = array<i32>} : memref<2x8xf32, #tpu.memory_space<vmem>>, vector<2x8xf32>,
    return
  }
}

</mosaic_0001>

<llo_original>
// kernel: tpu_custom_call.1
$region0: #{tpu_custom_call.1}
  #allocation0 [shape = 'u32[]', space=smem, size = 0x4, offset = 0x4, fixed_abs, tag = 'smem constant byte address 0x4 - core index']
  #allocation1 [shape = 'u32[144,128]{1,0:T(1,128)}', space=vmem, size = 0x12000, scoped, tag = 'internal scratch']
  #allocation2 [shape = 'f32[2,16]{1,0:T(2,128)}', space=vmem, size = 0x400, scoped, tag = 'scratch operand']
  #allocation3 [shape = 's32[2]{0}', space=sflag, size = 0x8, scoped, tag = 'scratch operand']
  #allocation11 [shape = 's32[]', space=sflag, size = 0x4, offset = 0, fixed_abs, tag = 'sflag constant byte address 0x0 - dummy sync flag']
  #allocation12 [shape = 's32[]', space=sflag, size = 0x4, offset = 0, fixed_abs, tag = 'sflag constant byte address 0x0 - dummy sync flag']
  %s0 = inlined_call_operand.vmem [shape: s32[2], index: 0, kind: input, shape index: {}]
  %s1 = inlined_call_operand.vmem [shape: f32[64,16], index: 1, kind: input, shape index: {}]
  %s2 = inlined_call_operand.vmem [shape: f32[2,32], index: 2, kind: input, shape index: {}]
  %s3 = inlined_call_operand.vmem [shape: f32[2,8,64], index: 3, kind: input, shape index: {}]
  %s4 = inlined_call_operand.vmem [shape: f32[2,8], index: 4, kind: input, shape index: {}]
  %s5 = inlined_call_operand.vmem [shape: f32[16,96], index: 5, kind: input, shape index: {}]
  %s6 = inlined_call_operand.vmem [shape: f32[32,96], index: 6, kind: input, shape index: {}]
  %s7 = inlined_call_operand.vmem [shape: f32[1,96], index: 7, kind: input, shape index: {}]
  %s8 = inlined_call_operand.vmem [shape: f32[1,96], index: 8, kind: input, shape index: {}]
  %s9 = inlined_call_operand.vmem [shape: f32[32,32], index: 9, kind: input, shape index: {}]
  %s10 = inlined_call_operand.vmem [shape: f32[64,32], index: 10, kind: input, shape index: {}]
  %s11 = inlined_call_operand.vmem [shape: f32[1,32], index: 11, kind: input, shape index: {}]
  %s12 = inlined_call_operand.vmem [shape: f32[1,32], index: 12, kind: input, shape index: {}]
  %s13 = inlined_call_operand.hbm [shape: f32[2,32], index: 13, kind: output, shape index: {0}]
  %s14 = inlined_call_operand.hbm [shape: f32[2,64], index: 14, kind: output, shape index: {1}]
  %s15 = inlined_call_operand.hbm [shape: f32[2,8], index: 15, kind: output, shape index: {2}]
  %16 = xla_tuple %s13, %s14, %s15
  %s17 = sld [smem:[#allocation0]]
  $region138: #{tpu_custom_call.1} parent=0
    _
  %s19 = ssub.s32 1, %s17
  %s20 = scalar_select 0, %s19, %s17
  $region1: #{tpu_custom_call.1} parent=0
    #allocation4 [shape = 'u8[512]{0}', space=smem, size = 0x200, scoped, tag = 'input window, operand 0, single buffered']
    #allocation5 [shape = 's32[1]{0}', space=sflag, size = 0x4, scoped, tag = 'scoped memory for tpu_custom_call.1']
    #allocation6 [shape = 's32[1]{0}', space=sflag, size = 0x4, scoped, tag = 'scoped memory for tpu_custom_call.1']
    #allocation7 [shape = 'u8[1024]{0}', space=vmem, size = 0x400, scoped, tag = 'output window, operand 0, single buffered']
    #allocation8 [shape = 'u8[1024]{0}', space=vmem, size = 0x400, scoped, tag = 'output window, operand 1, single buffered']
    #allocation9 [shape = 's32[1]{0}', space=sflag, size = 0x4, scoped, tag = 'scoped memory for tpu_custom_call.1']
    #allocation10 [shape = 'u8[1024]{0}', space=vmem, size = 0x400, scoped, tag = 'output window, operand 2, single buffered']
    %21 = vsyncpa [#allocation6], 0
    %22 = vsyncpa [#allocation5], 0
    %23 = vsyncpa [#allocation9], 0
    // Predicated region
    $region2: #{tpu_custom_call.1} parent=1 // pred_check
      _
    $region3: #{tpu_custom_call.1} parent=1 // pred_check_branch
      %25 = sbr.rel (0) target = $region5
    $region4: #{tpu_custom_call.1} parent=1 // pred_region
      %s27 = ssub.s32 16, 16
      %28 = vsyncadd [#allocation6], %s27
      %s30 = sshll.u32 %s0, 4
      %s31 = int_to_ptr.vmem [resolvable:$true] %s30
      %33 = dma.vmem_to_smem %s31, 16, [#allocation4], [#allocation6]
    $region5: #{tpu_custom_call.1} parent=1 // pred_fallthru
      _
    // Predicated region
    $region6: #{tpu_custom_call.1} parent=1 // pred_check
      _
    $region7: #{tpu_custom_call.1} parent=1 // pred_check_branch
      %35 = sbr.rel (0) target = $region9
    $region8: #{tpu_custom_call.1} parent=1 // pred_region
      _
    $region9: #{tpu_custom_call.1} parent=1 // pred_fallthru
      _
    // Predicated region
    $region10: #{tpu_custom_call.1} parent=1 // pred_check
      _
    $region11: #{tpu_custom_call.1} parent=1 // pred_check_branch
      %37 = sbr.rel (0) target = $region13
    $region12: #{tpu_custom_call.1} parent=1 // pred_region
      _
    $region13: #{tpu_custom_call.1} parent=1 // pred_fallthru
      _
    // Predicated region
    $region14: #{tpu_custom_call.1} parent=1 // pred_check
      _
    $region15: #{tpu_custom_call.1} parent=1 // pred_check_branch
      %39 = sbr.rel (0) target = $region17
    $region16: #{tpu_custom_call.1} parent=1 // pred_region
      _
    $region17: #{tpu_custom_call.1} parent=1 // pred_fallthru
      _
    // Predicated region
    $region18: #{tpu_custom_call.1} parent=1 // pred_check
      _
    $region19: #{tpu_custom_call.1} parent=1 // pred_check_branch
      %41 = sbr.rel (0) target = $region21
    $region20: #{tpu_custom_call.1} parent=1 // pred_region
      _
    $region21: #{tpu_custom_call.1} parent=1 // pred_fallthru
      _
    // Predicated region
    $region22: #{tpu_custom_call.1} parent=1 // pred_check
      _
    $region23: #{tpu_custom_call.1} parent=1 // pred_check_branch
      %43 = sbr.rel (0) target = $region25
    $region24: #{tpu_custom_call.1} parent=1 // pred_region
      _
    $region25: #{tpu_custom_call.1} parent=1 // pred_fallthru
      _
    // Predicated region
    $region26: #{tpu_custom_call.1} parent=1 // pred_check
      _
    $region27: #{tpu_custom_call.1} parent=1 // pred_check_branch
      %45 = sbr.rel (0) target = $region29
    $region28: #{tpu_custom_call.1} parent=1 // pred_region
      _
    $region29: #{tpu_custom_call.1} parent=1 // pred_fallthru
      _
    // Predicated region
    $region30: #{tpu_custom_call.1} parent=1 // pred_check
      _
    $region31: #{tpu_custom_call.1} parent=1 // pred_check_branch
      %47 = sbr.rel (0) target = $region33
    $region32: #{tpu_custom_call.1} parent=1 // pred_region
      _
    $region33: #{tpu_custom_call.1} parent=1 // pred_fallthru
      _
    // Predicated region
    $region34: #{tpu_custom_call.1} parent=1 // pred_check
      _
    $region35: #{tpu_custom_call.1} parent=1 // pred_check_branch
      %49 = sbr.rel (0) target = $region37
    $region36: #{tpu_custom_call.1} parent=1 // pred_region
      _
    $region37: #{tpu_custom_call.1} parent=1 // pred_fallthru
      _
    // Predicated region
    $region38: #{tpu_custom_call.1} parent=1 // pred_check
      _
    $region39: #{tpu_custom_call.1} parent=1 // pred_check_branch
      %51 = sbr.rel (0) target = $region41
    $region40: #{tpu_custom_call.1} parent=1 // pred_region
      _
    $region41: #{tpu_custom_call.1} parent=1 // pred_fallthru
      _
    // Predicated region
    $region42: #{tpu_custom_call.1} parent=1 // pred_check
      _
    $region43: #{tpu_custom_call.1} parent=1 // pred_check_branch
      %53 = sbr.rel (0) target = $region45
    $region44: #{tpu_custom_call.1} parent=1 // pred_region
      _
    $region45: #{tpu_custom_call.1} parent=1 // pred_fallthru
      _
    // Predicated region
    $region46: #{tpu_custom_call.1} parent=1 // pred_check
      _
    $region47: #{tpu_custom_call.1} parent=1 // pred_check_branch
      %55 = sbr.rel (0) target = $region49
    $region48: #{tpu_custom_call.1} parent=1 // pred_region
      _
    $region49: #{tpu_custom_call.1} parent=1 // pred_fallthru
      _
    // Predicated region
    $region50: #{tpu_custom_call.1} parent=1 // pred_check
      _
    $region51: #{tpu_custom_call.1} parent=1 // pred_check_branch
      %57 = sbr.rel (0) target = $region53
    $region52: #{tpu_custom_call.1} parent=1 // pred_region
      %58 = dma.done [#allocation6], 16
    $region53: #{tpu_custom_call.1} parent=1 // pred_fallthru
      _
    %59 = sfence
    %s60 = sld [smem:[#allocation4]]
    %s61 = scalar_lea.vmem %s1, %s60
    %p63 = scmp.lt.u32.totalorder 1, 8
    %p64 = pneg %p63
    // Predicated region
    $region54: #{tpu_custom_call.1} parent=1 // pred_check
      _
    $region55: #{tpu_custom_call.1} parent=1 // pred_check_branch
      %66 = sbr.rel (%p63) target = $region57
    $region56: #{tpu_custom_call.1} parent=1 // pred_region
      %s81 = sand.u32 1, 7
      %p82 = scmp.eq.s32.totalorder %s81, 0
      %p83 = pneg %p82
      // Predicated region
      $region69: #{tpu_custom_call.1} parent=56 // pred_check
        _
      $region70: #{tpu_custom_call.1} parent=56 // pred_check_branch
        %85 = sbr.rel (%p82) target = $region72
      $region71: #{tpu_custom_call.1} parent=56 // pred_region
        %s86 = sand.u32 1, 7
        %s87 = ssub.s32 1, %s86
        %s88 = scalar_lea.vmem %s61, %s87
        %s89 = ssub.s32 1, %s86
        %s90 = scalar_lea.vmem [#allocation2], %s89
        %s91 = sshllo.u32 0, %s86
        loop: start=0, step=1, limit=1
        $region73: #{tpu_custom_call.1} parent=71 // loop_pre_header
          _
        $region74: #{tpu_custom_call.1} parent=71 // loop_header
          %s93 = sphi 0, %s97
          %p94 = scmp.ge.s32.totalorder %s93, 1
          %s98 = sphi %s88, %s88
          %s99 = sphi %s90, %s90
        $region75: #{tpu_custom_call.1} parent=71 // loop_header_branch
          %96 = sbr.rel (%p94) target = $region79
        $region76: #{tpu_custom_call.1} parent=71 // loop_body
          %v100 = vld [vmem:[%s98] sm:%s91]
          %101 = vst [vmem:[%s99] sm:%s91] %v100
        $region77: #{tpu_custom_call.1} parent=71 // loop_footer
          %s97 = sadd.s32 1, %s93
        $region78: #{tpu_custom_call.1} parent=71 // loop_footer_branch
          %92 = sbr.rel target = $region74
        $region79: #{tpu_custom_call.1} parent=71 // loop_exit
          _
      $region72: #{tpu_custom_call.1} parent=56 // pred_fallthru
        _
    $region57: #{tpu_custom_call.1} parent=1 // pred_fallthru
      _
    // Predicated region
    $region58: #{tpu_custom_call.1} parent=1 // pred_check
      %p67 = pneg %p63
    $region59: #{tpu_custom_call.1} parent=1 // pred_check_branch
      %69 = sbr.rel (%p67) target = $region61
    $region60: #{tpu_custom_call.1} parent=1 // pred_region
      %s70 = sshllo.u32 0, 1
      loop: start=0, step=1, limit=1
      $region62: #{tpu_custom_call.1} parent=60 // loop_pre_header
        _
      $region63: #{tpu_custom_call.1} parent=60 // loop_header
        %s72 = sphi 0, %s76
        %p73 = scmp.ge.s32.totalorder %s72, 1
        %s77 = sphi %s61, %s61
        %s78 = sphi [#allocation2], [#allocation2]
      $region64: #{tpu_custom_call.1} parent=60 // loop_header_branch
        %75 = sbr.rel (%p73) target = $region68
      $region65: #{tpu_custom_call.1} parent=60 // loop_body
        %v79 = vld [vmem:[%s77] sm:%s70]
        %80 = vst [vmem:[%s78] sm:%s70] %v79
      $region66: #{tpu_custom_call.1} parent=60 // loop_footer
        %s76 = sadd.s32 1, %s72
      $region67: #{tpu_custom_call.1} parent=60 // loop_footer_branch
        %71 = sbr.rel target = $region63
      $region68: #{tpu_custom_call.1} parent=60 // loop_exit
        _
    $region61: #{tpu_custom_call.1} parent=1 // pred_fallthru
      _
    // Predicated region
    $region80: #{tpu_custom_call.1} parent=1 // pred_check
      _
    $region81: #{tpu_custom_call.1} parent=1 // pred_check_branch
      %104 = sbr.rel (0) target = $region83
    $region82: #{tpu_custom_call.1} parent=1 // pred_region
      %105 = vsyncadd [#allocation3], 16
    $region83: #{tpu_custom_call.1} parent=1 // pred_fallthru
      _
    %s106 = sld [smem:[#allocation4 + $0x1]]
    %s107 = scalar_lea.vmem %s1, %s106
    %s108 = scalar_lea.vmem [#allocation2], 1
    %s109 = scalar_lea.sflag [#allocation3], 1
    %p111 = scmp.lt.u32.totalorder 1, 8
    %p112 = pneg %p111
    // Predicated region
    $region84: #{tpu_custom_call.1} parent=1 // pred_check
      _
    $region85: #{tpu_custom_call.1} parent=1 // pred_check_branch
      %114 = sbr.rel (%p111) target = $region87
    $region86: #{tpu_custom_call.1} parent=1 // pred_region
      %s129 = sand.u32 1, 7
      %p130 = scmp.eq.s32.totalorder %s129, 0
      %p131 = pneg %p130
      // Predicated region
      $region99: #{tpu_custom_call.1} parent=86 // pred_check
        _
      $region100: #{tpu_custom_call.1} parent=86 // pred_check_branch
        %133 = sbr.rel (%p130) target = $region102
      $region101: #{tpu_custom_call.1} parent=86 // pred_region
        %s134 = sand.u32 1, 7
        %s135 = ssub.s32 1, %s134
        %s136 = scalar_lea.vmem %s107, %s135
        %s137 = ssub.s32 1, %s134
        %s138 = scalar_lea.vmem %s108, %s137 [#allocation2]
        %s139 = sshllo.u32 0, %s134
        loop: start=0, step=1, limit=1
        $region103: #{tpu_custom_call.1} parent=101 // loop_pre_header
          _
        $region104: #{tpu_custom_call.1} parent=101 // loop_header
          %s141 = sphi 0, %s145
          %p142 = scmp.ge.s32.totalorder %s141, 1
          %s146 = sphi %s136, %s136
          %s147 = sphi %s138, %s138
        $region105: #{tpu_custom_call.1} parent=101 // loop_header_branch
          %144 = sbr.rel (%p142) target = $region109
        $region106: #{tpu_custom_call.1} parent=101 // loop_body
          %v148 = vld [vmem:[%s146] sm:%s139]
          %149 = vst [vmem:[%s147] sm:%s139] %v148
        $region107: #{tpu_custom_call.1} parent=101 // loop_footer
          %s145 = sadd.s32 1, %s141
        $region108: #{tpu_custom_call.1} parent=101 // loop_footer_branch
          %140 = sbr.rel target = $region104
        $region109: #{tpu_custom_call.1} parent=101 // loop_exit
          _
      $region102: #{tpu_custom_call.1} parent=86 // pred_fallthru
        _
    $region87: #{tpu_custom_call.1} parent=1 // pred_fallthru
      _
    // Predicated region
    $region88: #{tpu_custom_call.1} parent=1 // pred_check
      %p115 = pneg %p111
    $region89: #{tpu_custom_call.1} parent=1 // pred_check_branch
      %117 = sbr.rel (%p115) target = $region91
    $region90: #{tpu_custom_call.1} parent=1 // pred_region
      %s118 = sshllo.u32 0, 1
      loop: start=0, step=1, limit=1
      $region92: #{tpu_custom_call.1} parent=90 // loop_pre_header
        _
      $region93: #{tpu_custom_call.1} parent=90 // loop_header
        %s120 = sphi 0, %s124
        %p121 = scmp.ge.s32.totalorder %s120, 1
        %s125 = sphi %s107, %s107
        %s126 = sphi %s108, %s108
      $region94: #{tpu_custom_call.1} parent=90 // loop_header_branch
        %123 = sbr.rel (%p121) target = $region98
      $region95: #{tpu_custom_call.1} parent=90 // loop_body
        %v127 = vld [vmem:[%s125] sm:%s118]
        %128 = vst [vmem:[%s126] sm:%s118] %v127
      $region96: #{tpu_custom_call.1} parent=90 // loop_footer
        %s124 = sadd.s32 1, %s120
      $region97: #{tpu_custom_call.1} parent=90 // loop_footer_branch
        %119 = sbr.rel target = $region93
      $region98: #{tpu_custom_call.1} parent=90 // loop_exit
        _
    $region91: #{tpu_custom_call.1} parent=1 // pred_fallthru
      _
    // Predicated region
    $region110: #{tpu_custom_call.1} parent=1 // pred_check
      _
    $region111: #{tpu_custom_call.1} parent=1 // pred_check_branch
      %152 = sbr.rel (0) target = $region113
    $region112: #{tpu_custom_call.1} parent=1 // pred_region
      %153 = vsyncadd %s109, 16
    $region113: #{tpu_custom_call.1} parent=1 // pred_fallthru
      _
    %s154 = smul.u32 1, 1
    %s155 = sshll.u32 %s154, 4
    %156 = dma.done [#allocation3], %s155
    %s157 = sshll.u32 %s154, 4
    %158 = dma.done %s109, %s157
    %v159 = vld [vmem:[#allocation2] sm:$0x3]
    %v160 = vld [vmem:[%s2] sm:$0x3]
    %v161 = vld [vmem:[%s5] sm:$0xff]
    %v162 = vld [vmem:[%s5 + $0x8] sm:$0xff]
    %v163 = vld [vmem:[%s7] sm:$0x1]
    %v165 = vlaneseq
    %v166 = vshrl.u32 %v165, 7
    %v167 = vsub.s32 0, %v166
    %v168 = vrot.slane %v163, %v167
    %vm170 = vcmask 130048
    %v172 = vsel %vm170, %v159, 0
    %174 = vmatprep.subr.mxu0 0.0
    %175 = vmatpush1.msra.mxu0 %v161
    %176 = vmatprep.subr.mxu0 0.0
    %177 = vmatpush1.msra.mxu0 %v162
    %178 = vmatprep.subr.mxu0 0.0
    %179 = vmatpush1.msra.mxu0 0.0
    %180 = vmatprep.subr.mxu0 0.0
    %181 = vmatpush1.msra.mxu0 0.0
    %182 = vmatprep.subr.mxu0 0.0
    %183 = vmatpush1.msra.mxu0 0.0
    %184 = vmatprep.subr.mxu0 0.0
    %185 = vmatpush1.msra.mxu0 0.0
    %186 = vmatprep.subr.mxu0 0.0
    %187 = vmatpush1.msra.mxu0 0.0
    %188 = vmatprep.subr.mxu0 0.0
    %189 = vmatpush1.msra.mxu0 0.0
    %190 = vmatprep.subr.mxu0 0.0
    %191 = vmatpush1.msra.mxu0 0.0
    %192 = vmatprep.subr.mxu0 0.0
    %193 = vmatpush1.msra.mxu0 0.0
    %194 = vmatprep.subr.mxu0 0.0
    %195 = vmatpush1.msra.mxu0 0.0
    %196 = vmatprep.subr.mxu0 0.0
    %197 = vmatpush1.msra.mxu0 0.0
    %198 = vmatprep.subr.mxu0 0.0
    %199 = vmatpush1.msra.mxu0 0.0
    %200 = vmatprep.subr.mxu0 0.0
    %201 = vmatpush1.msra.mxu0 0.0
    %202 = vmatprep.subr.mxu0 0.0
    %203 = vmatpush1.msra.mxu0 0.0
    %204 = vmatprep.subr.mxu0 0.0
    %205 = vmatpush1.msra.mxu0 0.0
    %206 = vmatprep.subr.mxu0 0.0
    %207 = vmatpush1.msra.mxu0 0.0
    %208 = vmatprep.subr.mxu0 0.0
    %209 = vmatpush1.msra.mxu0 0.0
    %210 = vmatprep.subr.mxu0 0.0
    %211 = vmatpush1.msra.mxu0 0.0
    %212 = vmatprep.subr.mxu0 0.0
    %213 = vmatpush1.msra.mxu0 0.0
    %214 = vmatprep.subr.mxu0 0.0
    %215 = vmatpush1.msra.mxu0 0.0
    %216 = vmatprep.subr.mxu0 0.0
    %217 = vmatpush1.msra.mxu0 0.0
    %218 = vmatprep.subr.mxu0 0.0
    %219 = vmatpush1.msra.mxu0 0.0
    %220 = vmatprep.subr.mxu0 0.0
    %221 = vmatpush1.msra.mxu0 0.0
    %222 = vmatprep.subr.mxu0 0.0
    %223 = vmatpush1.msra.mxu0 0.0
    %224 = vmatprep.subr.mxu0 0.0
    %225 = vmatpush1.msra.mxu0 0.0
    %226 = vmatprep.subr.mxu0 0.0
    %227 = vmatpush1.msra.mxu0 0.0
    %228 = vmatprep.subr.mxu0 0.0
    %229 = vmatpush1.msra.mxu0 0.0
    %230 = vmatprep.subr.mxu0 0.0
    %231 = vmatpush1.msra.mxu0 0.0
    %232 = vmatprep.subr.mxu0 0.0
    %233 = vmatpush1.msra.mxu0 0.0
    %234 = vmatprep.subr.mxu0 0.0
    %235 = vmatpush1.msra.mxu0 0.0
    %236 = vmatprep.subr.mxu0 0.0
    %237 = vmatpush1.msra.mxu0 0.0
    %238 = vmatprep.mubr.f32.mxu0 0.0
    %239 = vmatmul.mubr.f32.gmra.mrb[0].mxu0 %v172
    %v240 = vpop.f32.mrb[0].mxu0
    %v241 = vadd.f32 %v168, %v240
    %v242 = vpop.f32.mrb[0].mxu0
    %243 = vdwg.mxu0
    %v244 = vld [vmem:[%s6] sm:$0xff]
    %v245 = vld [vmem:[%s6 + $0x8] sm:$0xff]
    %v246 = vld [vmem:[%s6 + $0x10] sm:$0xff]
    %v247 = vld [vmem:[%s6 + $0x18] sm:$0xff]
    %v248 = vld [vmem:[%s8] sm:$0x1]
    %v250 = vlaneseq
    %v251 = vshrl.u32 %v250, 7
    %v252 = vsub.s32 0, %v251
    %v253 = vrot.slane %v248, %v252
    %vm255 = vcmask 261120
    %v257 = vsel %vm255, %v160, 0
    %259 = vmatprep.subr.mxu0 0.0
    %260 = vmatpush1.msra.mxu0 %v244
    %261 = vmatprep.subr.mxu0 0.0
    %262 = vmatpush1.msra.mxu0 %v245
    %263 = vmatprep.subr.mxu0 0.0
    %264 = vmatpush1.msra.mxu0 %v246
    %265 = vmatprep.subr.mxu0 0.0
    %266 = vmatpush1.msra.mxu0 %v247
    %267 = vmatprep.subr.mxu0 0.0
    %268 = vmatpush1.msra.mxu0 0.0
    %269 = vmatprep.subr.mxu0 0.0
    %270 = vmatpush1.msra.mxu0 0.0
    %271 = vmatprep.subr.mxu0 0.0
    %272 = vmatpush1.msra.mxu0 0.0
    %273 = vmatprep.subr.mxu0 0.0
    %274 = vmatpush1.msra.mxu0 0.0
    %275 = vmatprep.subr.mxu0 0.0
    %276 = vmatpush1.msra.mxu0 0.0
    %277 = vmatprep.subr.mxu0 0.0
    %278 = vmatpush1.msra.mxu0 0.0
    %279 = vmatprep.subr.mxu0 0.0
    %280 = vmatpush1.msra.mxu0 0.0
    %281 = vmatprep.subr.mxu0 0.0
    %282 = vmatpush1.msra.mxu0 0.0
    %283 = vmatprep.subr.mxu0 0.0
    %284 = vmatpush1.msra.mxu0 0.0
    %285 = vmatprep.subr.mxu0 0.0
    %286 = vmatpush1.msra.mxu0 0.0
    %287 = vmatprep.subr.mxu0 0.0
    %288 = vmatpush1.msra.mxu0 0.0
    %289 = vmatprep.subr.mxu0 0.0
    %290 = vmatpush1.msra.mxu0 0.0
    %291 = vmatprep.subr.mxu0 0.0
    %292 = vmatpush1.msra.mxu0 0.0
    %293 = vmatprep.subr.mxu0 0.0
    %294 = vmatpush1.msra.mxu0 0.0
    %295 = vmatprep.subr.mxu0 0.0
    %296 = vmatpush1.msra.mxu0 0.0
    %297 = vmatprep.subr.mxu0 0.0
    %298 = vmatpush1.msra.mxu0 0.0
    %299 = vmatprep.subr.mxu0 0.0
    %300 = vmatpush1.msra.mxu0 0.0
    %301 = vmatprep.subr.mxu0 0.0
    %302 = vmatpush1.msra.mxu0 0.0
    %303 = vmatprep.subr.mxu0 0.0
    %304 = vmatpush1.msra.mxu0 0.0
    %305 = vmatprep.subr.mxu0 0.0
    %306 = vmatpush1.msra.mxu0 0.0
    %307 = vmatprep.subr.mxu0 0.0
    %308 = vmatpush1.msra.mxu0 0.0
    %309 = vmatprep.subr.mxu0 0.0
    %310 = vmatpush1.msra.mxu0 0.0
    %311 = vmatprep.subr.mxu0 0.0
    %312 = vmatpush1.msra.mxu0 0.0
    %313 = vmatprep.subr.mxu0 0.0
    %314 = vmatpush1.msra.mxu0 0.0
    %315 = vmatprep.subr.mxu0 0.0
    %316 = vmatpush1.msra.mxu0 0.0
    %317 = vmatprep.subr.mxu0 0.0
    %318 = vmatpush1.msra.mxu0 0.0
    %319 = vmatprep.subr.mxu0 0.0
    %320 = vmatpush1.msra.mxu0 0.0
    %321 = vmatprep.subr.mxu0 0.0
    %322 = vmatpush1.msra.mxu0 0.0
    %323 = vmatprep.mubr.f32.mxu0 0.0
    %324 = vmatmul.mubr.f32.gmra.mrb[0].mxu0 %v257
    %v325 = vpop.f32.mrb[0].mxu0
    %v326 = vadd.f32 %v253, %v325
    %v327 = vpop.f32.mrb[0].mxu0
    %328 = vdwg.mxu0
    %v329 = vadd.f32 %v241, %v326
    %v330 = vxor.u32 %v329, 2147483648
    %v331 = vmul.f32 %v330, 1.442695
    %v332 = vpow.pop %v331
    %v333 = vadd.f32 %v332, 1.0
    %v334 = vrcp.pop %v333
    %v335 = vmul.f32 1.0, %v334
    %337 = vrot.lane.b32.xlu0 %v326, 64
    %v338 = vpop.permute.xlu0 %337
    %v340 = vmul.f32 %v335, %v338
    %342 = vrot.lane.b32.xlu0 %v340, 64
    %v343 = vpop.permute.xlu0 %342
    %v345 = vadd.f32 %v241, %v343
    %v346 = vtanh.pop %v345
    %v347 = vsub.f32 1.0, %v335
    %349 = vrot.lane.b32.xlu0 %v346, 96
    %v350 = vpop.permute.xlu0 %349
    %v352 = vmul.f32 %v347, %v350
    %353 = vrot.lane.b32.xlu0 %v160, 32
    %v354 = vpop.permute.xlu0 %353
    %v356 = vmul.f32 %v335, %v354
    %v357 = vadd.f32 %v352, %v356
    %v358 = vld [vmem:[%s3] sm:$0xff]
    %v359 = vld [vmem:[%s3 + $0x8] sm:$0xff]
    %v360 = vld [vmem:[%s10] sm:$0xff]
    %v361 = vld [vmem:[%s10 + $0x8] sm:$0xff]
    %v362 = vld [vmem:[%s10 + $0x10] sm:$0xff]
    %v363 = vld [vmem:[%s10 + $0x18] sm:$0xff]
    %v364 = vld [vmem:[%s10 + $0x20] sm:$0xff]
    %v365 = vld [vmem:[%s10 + $0x28] sm:$0xff]
    %v366 = vld [vmem:[%s10 + $0x30] sm:$0xff]
    %v367 = vld [vmem:[%s10 + $0x38] sm:$0xff]
    %vm368 = vcmask 523264
    %v370 = vsel %vm368, %v358, 0
    %v373 = vsel %vm368, %v359, 0
    %375 = vmatprep.subr.mxu0 0.0
    %376 = vmatpush1.msra.mxu0 %v360
    %377 = vmatprep.subr.mxu0 0.0
    %378 = vmatpush1.msra.mxu0 %v361
    %379 = vmatprep.subr.mxu0 0.0
    %380 = vmatpush1.msra.mxu0 %v362
    %381 = vmatprep.subr.mxu0 0.0
    %382 = vmatpush1.msra.mxu0 %v363
    %383 = vmatprep.subr.mxu0 0.0
    %384 = vmatpush1.msra.mxu0 %v364
    %385 = vmatprep.subr.mxu0 0.0
    %386 = vmatpush1.msra.mxu0 %v365
    %387 = vmatprep.subr.mxu0 0.0
    %388 = vmatpush1.msra.mxu0 %v366
    %389 = vmatprep.subr.mxu0 0.0
    %390 = vmatpush1.msra.mxu0 %v367
    %391 = vmatprep.subr.mxu0 0.0
    %392 = vmatpush1.msra.mxu0 0.0
    %393 = vmatprep.subr.mxu0 0.0
    %394 = vmatpush1.msra.mxu0 0.0
    %395 = vmatprep.subr.mxu0 0.0
    %396 = vmatpush1.msra.mxu0 0.0
    %397 = vmatprep.subr.mxu0 0.0
    %398 = vmatpush1.msra.mxu0 0.0
    %399 = vmatprep.subr.mxu0 0.0
    %400 = vmatpush1.msra.mxu0 0.0
    %401 = vmatprep.subr.mxu0 0.0
    %402 = vmatpush1.msra.mxu0 0.0
    %403 = vmatprep.subr.mxu0 0.0
    %404 = vmatpush1.msra.mxu0 0.0
    %405 = vmatprep.subr.mxu0 0.0
    %406 = vmatpush1.msra.mxu0 0.0
    %407 = vmatprep.subr.mxu0 0.0
    %408 = vmatpush1.msra.mxu0 0.0
    %409 = vmatprep.subr.mxu0 0.0
    %410 = vmatpush1.msra.mxu0 0.0
    %411 = vmatprep.subr.mxu0 0.0
    %412 = vmatpush1.msra.mxu0 0.0
    %413 = vmatprep.subr.mxu0 0.0
    %414 = vmatpush1.msra.mxu0 0.0
    %415 = vmatprep.subr.mxu0 0.0
    %416 = vmatpush1.msra.mxu0 0.0
    %417 = vmatprep.subr.mxu0 0.0
    %418 = vmatpush1.msra.mxu0 0.0
    %419 = vmatprep.subr.mxu0 0.0
    %420 = vmatpush1.msra.mxu0 0.0
    %421 = vmatprep.subr.mxu0 0.0
    %422 = vmatpush1.msra.mxu0 0.0
    %423 = vmatprep.subr.mxu0 0.0
    %424 = vmatpush1.msra.mxu0 0.0
    %425 = vmatprep.subr.mxu0 0.0
    %426 = vmatpush1.msra.mxu0 0.0
    %427 = vmatprep.subr.mxu0 0.0
    %428 = vmatpush1.msra.mxu0 0.0
    %429 = vmatprep.subr.mxu0 0.0
    %430 = vmatpush1.msra.mxu0 0.0
    %431 = vmatprep.subr.mxu0 0.0
    %432 = vmatpush1.msra.mxu0 0.0
    %433 = vmatprep.subr.mxu0 0.0
    %434 = vmatpush1.msra.mxu0 0.0
    %435 = vmatprep.subr.mxu0 0.0
    %436 = vmatpush1.msra.mxu0 0.0
    %437 = vmatprep.subr.mxu0 0.0
    %438 = vmatpush1.msra.mxu0 0.0
    %439 = vmatprep.mubr.f32.mxu0 0.0
    %440 = vmatmul.mubr.f32.gmra.mrb[0].mxu0 %v370
    %v441 = vpop.f32.mrb[0].mxu0
    %v442 = vadd.f32 0.0, %v441
    %v443 = vpop.f32.mrb[0].mxu0
    %444 = vmatprep.mubr.f32.mxu0 0.0
    %445 = vmatmul.mubr.f32.gmra.mrb[0].mxu0 %v373
    %v446 = vpop.f32.mrb[0].mxu0
    %v447 = vadd.f32 0.0, %v446
    %v448 = vpop.f32.mrb[0].mxu0
    %449 = vdwg.mxu0
    %v450 = vld [vmem:[%s9] sm:$0xff]
    %v451 = vld [vmem:[%s9 + $0x8] sm:$0xff]
    %v452 = vld [vmem:[%s9 + $0x10] sm:$0xff]
    %v453 = vld [vmem:[%s9 + $0x18] sm:$0xff]
    %455 = vrot.lane.b32.xlu0 %v357, 96
    %v456 = vpop.permute.xlu0 %455
    %v457 = vsel %vm255, %v456, 0
    %459 = vmatprep.subr.mxu0 0.0
    %460 = vmatpush1.msra.mxu0 %v450
    %461 = vmatprep.subr.mxu0 0.0
    %462 = vmatpush1.msra.mxu0 %v451
    %463 = vmatprep.subr.mxu0 0.0
    %464 = vmatpush1.msra.mxu0 %v452
    %465 = vmatprep.subr.mxu0 0.0
    %466 = vmatpush1.msra.mxu0 %v453
    %467 = vmatprep.subr.mxu0 0.0
    %468 = vmatpush1.msra.mxu0 0.0
    %469 = vmatprep.subr.mxu0 0.0
    %470 = vmatpush1.msra.mxu0 0.0
    %471 = vmatprep.subr.mxu0 0.0
    %472 = vmatpush1.msra.mxu0 0.0
    %473 = vmatprep.subr.mxu0 0.0
    %474 = vmatpush1.msra.mxu0 0.0
    %475 = vmatprep.subr.mxu0 0.0
    %476 = vmatpush1.msra.mxu0 0.0
    %477 = vmatprep.subr.mxu0 0.0
    %478 = vmatpush1.msra.mxu0 0.0
    %479 = vmatprep.subr.mxu0 0.0
    %480 = vmatpush1.msra.mxu0 0.0
    %481 = vmatprep.subr.mxu0 0.0
    %482 = vmatpush1.msra.mxu0 0.0
    %483 = vmatprep.subr.mxu0 0.0
    %484 = vmatpush1.msra.mxu0 0.0
    %485 = vmatprep.subr.mxu0 0.0
    %486 = vmatpush1.msra.mxu0 0.0
    %487 = vmatprep.subr.mxu0 0.0
    %488 = vmatpush1.msra.mxu0 0.0
    %489 = vmatprep.subr.mxu0 0.0
    %490 = vmatpush1.msra.mxu0 0.0
    %491 = vmatprep.subr.mxu0 0.0
    %492 = vmatpush1.msra.mxu0 0.0
    %493 = vmatprep.subr.mxu0 0.0
    %494 = vmatpush1.msra.mxu0 0.0
    %495 = vmatprep.subr.mxu0 0.0
    %496 = vmatpush1.msra.mxu0 0.0
    %497 = vmatprep.subr.mxu0 0.0
    %498 = vmatpush1.msra.mxu0 0.0
    %499 = vmatprep.subr.mxu0 0.0
    %500 = vmatpush1.msra.mxu0 0.0
    %501 = vmatprep.subr.mxu0 0.0
    %502 = vmatpush1.msra.mxu0 0.0
    %503 = vmatprep.subr.mxu0 0.0
    %504 = vmatpush1.msra.mxu0 0.0
    %505 = vmatprep.subr.mxu0 0.0
    %506 = vmatpush1.msra.mxu0 0.0
    %507 = vmatprep.subr.mxu0 0.0
    %508 = vmatpush1.msra.mxu0 0.0
    %509 = vmatprep.subr.mxu0 0.0
    %510 = vmatpush1.msra.mxu0 0.0
    %511 = vmatprep.subr.mxu0 0.0
    %512 = vmatpush1.msra.mxu0 0.0
    %513 = vmatprep.subr.mxu0 0.0
    %514 = vmatpush1.msra.mxu0 0.0
    %515 = vmatprep.subr.mxu0 0.0
    %516 = vmatpush1.msra.mxu0 0.0
    %517 = vmatprep.subr.mxu0 0.0
    %518 = vmatpush1.msra.mxu0 0.0
    %519 = vmatprep.subr.mxu0 0.0
    %520 = vmatpush1.msra.mxu0 0.0
    %521 = vmatprep.subr.mxu0 0.0
    %522 = vmatpush1.msra.mxu0 0.0
    %523 = vmatprep.mubr.f32.mxu0 0.0
    %524 = vmatmul.mubr.f32.gmra.mrb[0].mxu0 %v457
    %v525 = vpop.f32.mrb[0].mxu0
    %v526 = vadd.f32 0.0, %v525
    %v527 = vpop.f32.mrb[0].mxu0
    %528 = vdwg.mxu0
    %v531 = vunpack.c.l.s4 1966171168
    %v532 = vunpack.c.0.s8 %v531
    %v533 = vlaneseq
    %v534 = vshrl.u32 %v533, 7
    %v535 = vsub.s32 %v532, %v534
    %v536 = vrot.slane %v526, %v535
    %v537 = vcombine.high %v536, %v536
    %v539 = vunpack.c.l.s4 1966171168
    %v540 = vunpack.c.0.s8 %v539
    %v541 = vlaneseq
    %v542 = vshrl.u32 %v541, 7
    %v543 = vsub.s32 %v540, %v542
    %v544 = vrot.slane %v536, %v543
    %v546 = vunpack.c.l.s4 1966171168
    %v547 = vunpack.c.0.s8 %v546
    %v548 = vlaneseq
    %v549 = vshrl.u32 %v548, 7
    %v550 = vsub.s32 %v547, %v549
    %v551 = vrot.slane %v537, %v550
    %v552 = vlaneseq
    %v553 = vshrl.u32 %v552, 7
    %v554 = vsub.s32 0, %v553
    %v555 = vrot.slane %v544, %v554
    %v556 = vlaneseq
    %v557 = vshrl.u32 %v556, 7
    %v558 = vsub.s32 0, %v557
    %v559 = vrot.slane %v551, %v558
    %v562 = vadd.f32 %v555, %v442
    %v563 = vadd.f32 %v559, %v447
    %v564 = vld [vmem:[%s11] sm:$0x1]
    %v566 = vlaneseq
    %v567 = vshrl.u32 %v566, 7
    %v568 = vsub.s32 0, %v567
    %v569 = vrot.slane %v564, %v568
    %v571 = vadd.f32 %v562, %v569
    %v572 = vadd.f32 %v563, %v569
    %v573 = vtanh.pop %v571
    %v574 = vtanh.pop %v572
    %v575 = vld [vmem:[%s12] sm:$0x1]
    %v577 = vlaneseq
    %v578 = vshrl.u32 %v577, 7
    %v579 = vsub.s32 0, %v578
    %v580 = vrot.slane %v575, %v579
    %v582 = vmul.f32 %v573, %v580
    %v583 = vmul.f32 %v574, %v580
    %v584 = vsel %vm255, %v582, 0.0
    %585 = vadd.xlane.f32.xlu0 %v584
    %v586 = vpop.xlane.xlu0 %585
    %v587 = vsel %vm255, %v583, 0.0
    %588 = vadd.xlane.f32.xlu0 %v587
    %v589 = vpop.xlane.xlu0 %588
    %v590 = vld [vmem:[%s4] sm:$0x3]
    %v592 = vlaneseq
    %v593 = vshrl.u32 %v592, 7
    %v594 = vsub.s32 0, %v593
    %v595 = vrot.slane %v590, %v594
    %597 = vbcast.lane.b32.xlu0 %v595, 256
    %v598 = vpop.permute.xlu0 %597
    %v599 = vlaneseq
    %v600 = vshrl.u32 %v599, 7
    %v601 = vsub.s32 1, %v600
    %v602 = vrot.slane %v590, %v601
    %604 = vbcast.lane.b32.xlu0 %v602, 256
    %v605 = vpop.permute.xlu0 %604
    %v608 = vadd.f32 %v586, %v598
    %v609 = vadd.f32 %v589, %v605
    %612 = vset.pattern.permute.xlu0 0
    %613 = vperm.xlu0 %612, %v608
    %v614 = vpop.permute.xlu0 %613
    %615 = vset.pattern.permute.xlu0 0
    %616 = vperm.xlu0 %615, %v609
    %v617 = vpop.permute.xlu0 %616
    %v618 = vlaneseq
    %v619 = vand.u32 %v618, 127
    %v620 = vlaneseq
    %v621 = vshrl.u32 %v620, 7
    %v622 = vsub.s32 %v619, %v621
    %v623 = vrot.slane %v614, %v622
    %v624 = vlaneseq
    %v625 = vshrl.u32 %v624, 7
    %v626 = vsub.s32 %v619, %v625
    %v627 = vrot.slane %v617, %v626
    %vm628 = vcmask 1041409
    %v629 = vsel %vm628, %v627, %v623
    %vm631 = vcmask 58368
    %v632 = vsel %vm631, %v629, -inf
    %633 = vmax.xlane.f32.xlu0 %v632
    %v634 = vpop.xlane.xlu0 %633
    %v636 = vlaneseq
    %v637 = vshrl.u32 %v636, 7
    %v638 = vsub.s32 0, %v637
    %v639 = vrot.slane %v634, %v638
    %v640 = vlaneseq
    %v641 = vshrl.u32 %v640, 7
    %v642 = vsub.s32 1, %v641
    %v643 = vrot.slane %v634, %v642
    %v646 = vsub.f32 %v608, %v639
    %v647 = vsub.f32 %v609, %v643
    %v648 = vmul.f32 %v646, 1.442695
    %v649 = vpow.pop %v648
    %v650 = vmul.f32 %v647, 1.442695
    %v651 = vpow.pop %v650
    %654 = vset.pattern.permute.xlu0 0
    %655 = vperm.xlu0 %654, %v649
    %v656 = vpop.permute.xlu0 %655
    %657 = vset.pattern.permute.xlu0 0
    %658 = vperm.xlu0 %657, %v651
    %v659 = vpop.permute.xlu0 %658
    %v660 = vlaneseq
    %v661 = vshrl.u32 %v660, 7
    %v662 = vsub.s32 %v619, %v661
    %v663 = vrot.slane %v656, %v662
    %v664 = vlaneseq
    %v665 = vshrl.u32 %v664, 7
    %v666 = vsub.s32 %v619, %v665
    %v667 = vrot.slane %v659, %v666
    %v668 = vsel %vm628, %v667, %v663
    %v670 = vsel %vm631, %v668, 0.0
    %671 = vadd.xlane.f32.xlu0 %v670
    %v672 = vpop.xlane.xlu0 %671
    %v673 = vrcp.pop %v672
    %v674 = vmul.f32 %v672, %v673
    %v675 = vsub.f32 2.0, %v674
    %v676 = vmul.f32 %v673, %v675
    %v678 = vlaneseq
    %v679 = vshrl.u32 %v678, 7
    %v680 = vsub.s32 0, %v679
    %v681 = vrot.slane %v676, %v680
    %v682 = vlaneseq
    %v683 = vshrl.u32 %v682, 7
    %v684 = vsub.s32 1, %v683
    %v685 = vrot.slane %v676, %v684
    %v688 = vmul.f32 %v649, %v681
    %v689 = vmul.f32 %v651, %v685
    %691 = vset.pattern.permute.xlu0 0
    %692 = vperm.xlu0 %691, %v688
    %v693 = vpop.permute.xlu0 %692
    %696 = vset.pattern.permute.xlu0 0
    %697 = vperm.xlu0 %696, %v689
    %v698 = vpop.permute.xlu0 %697
    %v700 = vmul.f32 %v693, %v358
    %v701 = vmul.f32 %v698, %v359
    %v702 = vsel %vm368, %v700, 0.0
    %v703 = vrot.slane %v702, 4
    %v704 = vadd.f32 %v702, %v703
    %v705 = vrot.slane %v704, 2
    %v706 = vadd.f32 %v704, %v705
    %v707 = vrot.slane %v706, 1
    %v708 = vadd.f32 %v706, %v707
    %v709 = vsel %vm368, %v701, 0.0
    %v710 = vrot.slane %v709, 4
    %v711 = vadd.f32 %v709, %v710
    %v712 = vrot.slane %v711, 2
    %v713 = vadd.f32 %v711, %v712
    %v714 = vrot.slane %v713, 1
    %v715 = vadd.f32 %v713, %v714
    %vm717 = vcmask 254976
    %718 = vst.msk [vmem:[#allocation7] sm:$0x3] %vm717, %v456
    %v721 = vsel %vm628, %v715, %v708
    %vm723 = vcmask 517120
    %724 = vst.msk [vmem:[#allocation8] sm:$0x3] %vm723, %v721
    %v725 = vlaneseq
    %v726 = vshrl.u32 %v725, 7
    %v727 = vsub.s32 %v619, %v726
    %v728 = vrot.slane %v693, %v727
    %v729 = vlaneseq
    %v730 = vshrl.u32 %v729, 7
    %v731 = vsub.s32 %v619, %v730
    %v732 = vrot.slane %v698, %v731
    %v733 = vsel %vm628, %v732, %v728
    %735 = vst.msk [vmem:[#allocation10] sm:$0x3] %vm631, %v733
    // Predicated region
    $region114: #{tpu_custom_call.1} parent=1 // pred_check
      _
    $region115: #{tpu_custom_call.1} parent=1 // pred_check_branch
      %737 = sbr.rel (0) target = $region117
    $region116: #{tpu_custom_call.1} parent=1 // pred_region
      %s739 = ssub.s32 32, 32
      %740 = vsyncadd [#allocation5], %s739
      %s742 = sshll.u32 [#allocation7], 4
      %s743 = int_to_ptr.vmem [resolvable:$true] %s742
      %745 = dma.vmem_to_hbm [thread:$0]  %s743, 32, %s13, [#allocation5]
    $region117: #{tpu_custom_call.1} parent=1 // pred_fallthru
      _
    // Predicated region
    $region118: #{tpu_custom_call.1} parent=1 // pred_check
      _
    $region119: #{tpu_custom_call.1} parent=1 // pred_check_branch
      %747 = sbr.rel (0) target = $region121
    $region120: #{tpu_custom_call.1} parent=1 // pred_region
      %s749 = ssub.s32 32, 32
      %750 = vsyncadd [#allocation9], %s749
      %s752 = sshll.u32 [#allocation8], 4
      %s753 = int_to_ptr.vmem [resolvable:$true] %s752
      %755 = dma.vmem_to_hbm [thread:$0]  %s753, 32, %s14, [#allocation9]
    $region121: #{tpu_custom_call.1} parent=1 // pred_fallthru
      _
    // Predicated region
    $region122: #{tpu_custom_call.1} parent=1 // pred_check
      _
    $region123: #{tpu_custom_call.1} parent=1 // pred_check_branch
      %757 = sbr.rel (0) target = $region125
    $region124: #{tpu_custom_call.1} parent=1 // pred_region
      %s759 = ssub.s32 32, 32
      %760 = vsyncadd [#allocation9], %s759
      %s762 = sshll.u32 [#allocation10], 4
      %s763 = int_to_ptr.vmem [resolvable:$true] %s762
      %765 = dma.vmem_to_hbm [thread:$0]  %s763, 32, %s15, [#allocation9]
    $region125: #{tpu_custom_call.1} parent=1 // pred_fallthru
      _
    // Predicated region
    $region126: #{tpu_custom_call.1} parent=1 // pred_check
      _
    $region127: #{tpu_custom_call.1} parent=1 // pred_check_branch
      %767 = sbr.rel (0) target = $region129
    $region128: #{tpu_custom_call.1} parent=1 // pred_region
      %768 = dma.done [#allocation5], 32
    $region129: #{tpu_custom_call.1} parent=1 // pred_fallthru
      _
    // Predicated region
    $region130: #{tpu_custom_call.1} parent=1 // pred_check
      _
    $region131: #{tpu_custom_call.1} parent=1 // pred_check_branch
      %770 = sbr.rel (0) target = $region133
    $region132: #{tpu_custom_call.1} parent=1 // pred_region
      %771 = dma.done [#allocation9], 32
    $region133: #{tpu_custom_call.1} parent=1 // pred_fallthru
      _
    // Predicated region
    $region134: #{tpu_custom_call.1} parent=1 // pred_check
      _
    $region135: #{tpu_custom_call.1} parent=1 // pred_check_branch
      %773 = sbr.rel (0) target = $region137
    $region136: #{tpu_custom_call.1} parent=1 // pred_region
      %774 = dma.done [#allocation9], 32
    $region137: #{tpu_custom_call.1} parent=1 // pred_fallthru
      _
    %775 = vsyncpa [#allocation5], 1
    %776 = vsyncpa [#allocation9], 1
    %777 = vsyncpa [#allocation6], 1
  %778 = vsyncmov [#allocation3]
  %s779 = vpop.sfrf %778
  %p780 = scmp.eq.s32.totalorder %s779, 0
  %p781 = pneg %p780
  %783 = shalt.err (%p781)
  %s784 = scalar_lea.sflag [#allocation3], 1
  %785 = vsyncmov %s784
  %s786 = vpop.sfrf %785
  %p787 = scmp.eq.s32.totalorder %s786, 0
  %p788 = pneg %p787
  %790 = shalt.err (%p788)

</llo_original>
